<compile_context>
chip_gen: v5e
topology: v5e:2x2
jax: 0.10.0
libtpu: 0.0.40
codegen_flags: <defaults>
</compile_context>

<pallas_src>
import functools
import math

import numpy as np
import jax
import jax.numpy as jnp
from jax import lax
from jax.experimental import pallas as pl
from jax.experimental.pallas import tpu as pltpu


def _conbr_kernel(x_ref, w_ref, sel_ref, selt_ref, alpha_ref, o_ref, xs_ref, *,
                  n_taps, c_in, l_out, tn, dilation):
    """One grid step: TN samples -> lane-dense (C_out, TN*L_out) output slab.

    x_ref:     (TN, C_in, L_pad)       zero-padded inputs for this batch tile
    w_ref:     (C_out, K*C_in + 1)     stacked conv weights, bias in last column
    sel_ref:   (R, TN)   [VMEM]        reduce selector, entries 1/L_out on each
                                       sample's lane segment (R = TN*L_out)
    selt_ref:  (TN, R)   [VMEM]        0/1 broadcast selector (transpose mask)
    alpha_ref: (1,)      [SMEM]        PReLU slope
    o_ref:     (C_out, R)              normalized + PReLU'd output slab
    xs_ref:    (K*C_in + 1, R)         VMEM scratch: im2col slab (+ ones row)
    """
    r = tn * l_out
    rows = n_taps * c_in

    # --- stage im2col slab: row k*C_in + c, lane t*L_out + l = x[t, c, l + k*d]
    for t in range(tn):                                       # static unroll
        xt = x_ref[t]                                         # (C_in, L_pad)
        xs_t = jnp.concatenate(
            [xt[:, k * dilation:k * dilation + l_out] for k in range(n_taps)],
            axis=0)                                           # (K*C_in, L_out)
        xs_ref[0:rows, t * l_out:(t + 1) * l_out] = xs_t
    # ones row -> picks up the bias column of w_ref in the same matmul.
    # (Written every step: scratch is per-core, and with a "parallel" grid axis
    #  a core other than the one running program_id==0 must also see it.)
    xs_ref[rows:rows + 1, :] = jnp.ones((1, r), dtype=xs_ref.dtype)

    # --- conv over all taps & samples in a single MXU pass (f32 accumulation)
    acc = jnp.dot(w_ref[...], xs_ref[...],
                  preferred_element_type=jnp.float32)         # (C_out, R)

    # --- per-sample InstanceNorm on the lane-dense slab (selector matmuls,
    #     no cross-lane reshape).  sel already carries the 1/L_out factor.
    sel = sel_ref[...]                                        # (R, TN)
    selt = selt_ref[...]                                      # (TN, R)
    mean = jnp.dot(acc, sel, preferred_element_type=jnp.float32)      # (C_out, TN)
    mean_b = jnp.dot(mean, selt, preferred_element_type=jnp.float32)  # (C_out, R)
    cen = acc - mean_b
    var = jnp.dot(cen * cen, sel, preferred_element_type=jnp.float32)
    var_b = jnp.dot(var, selt, preferred_element_type=jnp.float32)
    y = cen * lax.rsqrt(var_b + 1e-5)

    # --- PReLU (single shared slope, scalar read from SMEM)
    a = alpha_ref[0]
    o_ref[...] = jnp.where(y > 0, y, a * y).astype(o_ref.dtype)


def _choose_samples_per_step(n, l_out):
    # Small batch: one lane-dense block covering the whole (padded) batch.
    # Large batch: tile so each block's lane width (tn*l_out) is a multiple of
    # 128 (unmasked stores / aligned DMA) and >=256 lanes, leaving several
    # "parallel" batch tiles for v7x's 2 TensorCores.
    if n * l_out <= 2048:
        return n
    align = 128 // math.gcd(l_out, 128)
    tn = align
    while tn * l_out < 256:
        tn += align
    # TODO(synk): for pathological l_out (odd & huge) tn*l_out can get large;
    # add a VMEM-budget cap plus a length-tiled ("arbitrary") grid axis.
    return tn


def conbr_block_forward(x, weight, bias, alpha, *, stride, dilation, padding=3):
    """x: (N, C_in, L); weight: (C_out, C_in, K); bias: (C_out,); alpha scalar."""
    n, c_in, l = x.shape
    c_out, c_in_w, k = weight.shape
    assert c_in_w == c_in
    if stride != 1:
        # TODO(synk): general stride needs a strided lane gather
        # (pl.ds(k*dilation, L_out, stride=stride)) in the im2col staging.
        raise NotImplementedError("conbr_block Pallas kernel supports stride=1 only")

    l_out = (l + 2 * padding - dilation * (k - 1) - 1) // stride + 1
    l_pad = l + 2 * padding

    tn = _choose_samples_per_step(n, l_out)
    n_pad = ((n + tn - 1) // tn) * tn
    r = tn * l_out

    # Glue (plain JAX): zero-pad length & batch, stack weights tap-major, fold bias.
    x_pad = jnp.pad(x, ((0, n_pad - n), (0, 0), (padding, padding)))      # (Np, C_in, L_pad)
    w_stack = jnp.transpose(weight, (0, 2, 1)).reshape(c_out, k * c_in)   # (C_out, K*C_in)
    w_aug = jnp.concatenate(
        [w_stack, jnp.reshape(bias, (c_out, 1)).astype(w_stack.dtype)], axis=1)
    alpha_arr = jnp.asarray(alpha, jnp.float32).reshape(1)

    # Selector matrices, built once on the host.  Their BlockSpec index_map is
    # constant, so they are copied to VMEM once and reused for every grid step.
    seg = np.arange(r) // l_out                                           # (R,)
    sel_np = (seg[:, None] == np.arange(tn)[None, :]).astype(np.float32) / float(l_out)
    selt_np = (np.arange(tn)[:, None] == seg[None, :]).astype(np.float32)
    sel = jnp.asarray(sel_np)                                             # (R, TN)
    selt = jnp.asarray(selt_np)                                           # (TN, R)

    grid = (n_pad // tn,)
    kernel = functools.partial(_conbr_kernel, n_taps=k, c_in=c_in,
                               l_out=l_out, tn=tn, dilation=dilation)

    # TODO(synk): for very long L, add a second ("arbitrary") grid axis over the
    # length with halo slices + running sum / sum-of-squares scratch so tiles
    # stay within VMEM (especially v7x's 64 MiB).
    out2d = pl.pallas_call(
        kernel,
        out_shape=jax.ShapeDtypeStruct((c_out, n_pad * l_out), x.dtype),
        grid_spec=pltpu.PrefetchScalarGridSpec(
            num_scalar_prefetch=0,
            grid=grid,
            in_specs=[
                pl.BlockSpec((tn, c_in, l_pad), lambda i: (i, 0, 0)),
                pl.BlockSpec((c_out, k * c_in + 1), lambda i: (0, 0)),
                pl.BlockSpec((r, tn), lambda i: (0, 0)),
                pl.BlockSpec((tn, r), lambda i: (0, 0)),
                pl.BlockSpec(memory_space=pltpu.MemorySpace.SMEM),
            ],
            out_specs=pl.BlockSpec((c_out, r), lambda i: (0, i)),
            scratch_shapes=[pltpu.VMEM((k * c_in + 1, r), x.dtype)],
        ),
        compiler_params=pltpu.CompilerParams(
            dimension_semantics=("parallel",),
        ),
    )(x_pad, w_aug, sel, selt, alpha_arr)

    # Layout plumbing back to PyTorch NCL order.
    out = out2d.reshape(c_out, n_pad, l_out).transpose(1, 0, 2)
    return out[:n]


def _reference(x, weight, bias, alpha, *, stride, dilation, padding=3):
    y = jax.lax.conv_general_dilated(
        x, weight,
        window_strides=(stride,),
        padding=[(padding, padding)],
        rhs_dilation=(dilation,),
        dimension_numbers=("NCH", "OIH", "NCH"),
    ) + bias.reshape(1, -1, 1)
    mean = jnp.mean(y, axis=2, keepdims=True)
    var = jnp.mean((y - mean) ** 2, axis=2, keepdims=True)
    y = (y - mean) * jax.lax.rsqrt(var + 1e-5)
    return jnp.where(y > 0, y, alpha * y)


if __name__ == "__main__":
    # conbr_block(in_layer=4, out_layer=8, kernel_size=7, stride=1, dilation=1)
    in_layer, out_layer, kernel_size, stride, dilation = 4, 8, 7, 1, 1
    N, L = 2, 16

    key = jax.random.PRNGKey(0)
    kx, kw, kb = jax.random.split(key, 3)
    x = jax.random.normal(kx, (N, in_layer, L), dtype=jnp.float32)
    fan_in = in_layer * kernel_size
    bound = 1.0 / (fan_in ** 0.5)
    weight = jax.random.uniform(kw, (out_layer, in_layer, kernel_size),
                                jnp.float32, -bound, bound)
    bias = jax.random.uniform(kb, (out_layer,), jnp.float32, -bound, bound)
    alpha = jnp.float32(0.25)  # PReLU default init

    out = conbr_block_forward(x, weight, bias, alpha,
                              stride=stride, dilation=dilation, padding=3)
    out = jax.block_until_ready(out)

    ref = _reference(x, weight, bias, alpha,
                     stride=stride, dilation=dilation, padding=3)
    assert out.shape == ref.shape == (N, out_layer, L)
    assert jnp.allclose(out, ref, atol=1e-4, rtol=1e-4)

    print("KERNEL_OK")
</pallas_src>

<mosaic_0001>
module attributes {stable_mosaic.version = 11 : i64} {
  func.func @_conbr_kernel(%arg0: i32, %arg1: memref<2x4x22xf32, #tpu.memory_space<vmem>>, %arg2: memref<8x29xf32, #tpu.memory_space<vmem>>, %arg3: memref<32x2xf32, #tpu.memory_space<vmem>>, %arg4: memref<2x32xf32, #tpu.memory_space<vmem>>, %arg5: memref<1xf32, #tpu.memory_space<smem>>, %arg6: memref<8x32xf32, #tpu.memory_space<vmem>>, %arg7: memref<29x32xf32, #tpu.memory_space<vmem>>) attributes {dimension_semantics = [#tpu.dimension_semantics<parallel>], iteration_bounds = array<i64: 1>, scalar_prefetch = 0 : i64, scratch_operands = 1 : i64, tpu.core_type = #tpu.core_type<tc>, window_params = [{transform_indices = @transform_0, window_bounds = array<i64: 2, 4, 22>}, {pipeline_mode = #tpu.pipeline_mode<synchronous>, transform_indices = @transform_1, window_bounds = array<i64: 8, 29>}, {pipeline_mode = #tpu.pipeline_mode<synchronous>, transform_indices = @transform_2, window_bounds = array<i64: 32, 2>}, {pipeline_mode = #tpu.pipeline_mode<synchronous>, transform_indices = @transform_3, window_bounds = array<i64: 2, 32>}, {transform_indices = @transform_4, window_bounds = array<i64: 1>}, {transform_indices = @transform_5, window_bounds = array<i64: 8, 32>}]} {
    %c0 = arith.constant 0 : index
    %c0_0 = arith.constant 0 : index
    %c0_1 = arith.constant 0 : index
    %0 = vector.load %arg1[%c0, %c0_0, %c0_1] : memref<2x4x22xf32, #tpu.memory_space<vmem>>, vector<1x4x22xf32>
    %1 = vector.shape_cast %0 : vector<1x4x22xf32> to vector<4x22xf32>
    %2 = vector.extract_strided_slice %1 {offsets = [0, 0], sizes = [4, 16], strides = [1, 1]} : vector<4x22xf32> to vector<4x16xf32>
    %3 = vector.extract_strided_slice %1 {offsets = [0, 1], sizes = [4, 16], strides = [1, 1]} : vector<4x22xf32> to vector<4x16xf32>
    %4 = vector.extract_strided_slice %1 {offsets = [0, 2], sizes = [4, 16], strides = [1, 1]} : vector<4x22xf32> to vector<4x16xf32>
    %5 = vector.extract_strided_slice %1 {offsets = [0, 3], sizes = [4, 16], strides = [1, 1]} : vector<4x22xf32> to vector<4x16xf32>
    %6 = vector.extract_strided_slice %1 {offsets = [0, 4], sizes = [4, 16], strides = [1, 1]} : vector<4x22xf32> to vector<4x16xf32>
    %7 = vector.extract_strided_slice %1 {offsets = [0, 5], sizes = [4, 16], strides = [1, 1]} : vector<4x22xf32> to vector<4x16xf32>
    %8 = vector.extract_strided_slice %1 {offsets = [0, 6], sizes = [4, 16], strides = [1, 1]} : vector<4x22xf32> to vector<4x16xf32>
    %9 = tpu.concatenate %2, %3, %4, %5, %6, %7, %8 in 0 : vector<4x16xf32>, vector<4x16xf32>, vector<4x16xf32>, vector<4x16xf32>, vector<4x16xf32>, vector<4x16xf32>, vector<4x16xf32> -> vector<28x16xf32>
    %c0_2 = arith.constant 0 : index
    %c0_3 = arith.constant 0 : index
    %10 = vector.load %arg7[%c0_2, %c0_3] : memref<29x32xf32, #tpu.memory_space<vmem>>, vector<28x16xf32>
    tpu.vector_store %arg7[%c0_2, %c0_3], %9 {strides = array<i32>} : memref<29x32xf32, #tpu.memory_space<vmem>>, vector<28x16xf32>,
    %c1 = arith.constant 1 : index
    %c0_4 = arith.constant 0 : index
    %c0_5 = arith.constant 0 : index
    %11 = vector.load %arg1[%c1, %c0_4, %c0_5] : memref<2x4x22xf32, #tpu.memory_space<vmem>>, vector<1x4x22xf32>
    %12 = vector.shape_cast %11 : vector<1x4x22xf32> to vector<4x22xf32>
    %13 = vector.extract_strided_slice %12 {offsets = [0, 0], sizes = [4, 16], strides = [1, 1]} : vector<4x22xf32> to vector<4x16xf32>
    %14 = vector.extract_strided_slice %12 {offsets = [0, 1], sizes = [4, 16], strides = [1, 1]} : vector<4x22xf32> to vector<4x16xf32>
    %15 = vector.extract_strided_slice %12 {offsets = [0, 2], sizes = [4, 16], strides = [1, 1]} : vector<4x22xf32> to vector<4x16xf32>
    %16 = vector.extract_strided_slice %12 {offsets = [0, 3], sizes = [4, 16], strides = [1, 1]} : vector<4x22xf32> to vector<4x16xf32>
    %17 = vector.extract_strided_slice %12 {offsets = [0, 4], sizes = [4, 16], strides = [1, 1]} : vector<4x22xf32> to vector<4x16xf32>
    %18 = vector.extract_strided_slice %12 {offsets = [0, 5], sizes = [4, 16], strides = [1, 1]} : vector<4x22xf32> to vector<4x16xf32>
    %19 = vector.extract_strided_slice %12 {offsets = [0, 6], sizes = [4, 16], strides = [1, 1]} : vector<4x22xf32> to vector<4x16xf32>
    %20 = tpu.concatenate %13, %14, %15, %16, %17, %18, %19 in 0 : vector<4x16xf32>, vector<4x16xf32>, vector<4x16xf32>, vector<4x16xf32>, vector<4x16xf32>, vector<4x16xf32>, vector<4x16xf32> -> vector<28x16xf32>
    %c0_6 = arith.constant 0 : index
    %c16 = arith.constant 16 : index
    %21 = vector.load %arg7[%c0_6, %c16] : memref<29x32xf32, #tpu.memory_space<vmem>>, vector<28x16xf32>
    tpu.vector_store %arg7[%c0_6, %c16], %20 {strides = array<i32>} : memref<29x32xf32, #tpu.memory_space<vmem>>, vector<28x16xf32>,
    %cst = arith.constant 1.000000e+00 : f32
    %22 = vector.broadcast %cst : f32 to vector<1x32xf32>
    %c28 = arith.constant 28 : index
    %c0_7 = arith.constant 0 : index
    %23 = vector.load %arg7[%c28, %c0_7] : memref<29x32xf32, #tpu.memory_space<vmem>>, vector<1x32xf32>
    tpu.vector_store %arg7[%c28, %c0_7], %22 {strides = array<i32>} : memref<29x32xf32, #tpu.memory_space<vmem>>, vector<1x32xf32>,
    %c0_8 = arith.constant 0 : index
    %c0_9 = arith.constant 0 : index
    %24 = vector.load %arg2[%c0_8, %c0_9] : memref<8x29xf32, #tpu.memory_space<vmem>>, vector<8x29xf32>
    %c0_10 = arith.constant 0 : index
    %c0_11 = arith.constant 0 : index
    %25 = vector.load %arg7[%c0_10, %c0_11] : memref<29x32xf32, #tpu.memory_space<vmem>>, vector<29x32xf32>
    %cst_12 = arith.constant dense<0.000000e+00> : vector<8x32xf32>
    %26 = tpu.matmul %24, %25, %cst_12 {dimension_numbers = #tpu.dot_dimension_numbers<[1], [0], [0], [1], [0, 0, 1, 1], [], []>} : vector<8x29xf32>, vector<29x32xf32>, vector<8x32xf32> -> vector<8x32xf32>
    %c0_13 = arith.constant 0 : index
    %c0_14 = arith.constant 0 : index
    %27 = vector.load %arg3[%c0_13, %c0_14] : memref<32x2xf32, #tpu.memory_space<vmem>>, vector<32x2xf32>
    %c0_15 = arith.constant 0 : index
    %c0_16 = arith.constant 0 : index
    %28 = vector.load %arg4[%c0_15, %c0_16] : memref<2x32xf32, #tpu.memory_space<vmem>>, vector<2x32xf32>
    %cst_17 = arith.constant dense<0.000000e+00> : vector<8x2xf32>
    %29 = tpu.matmul %26, %27, %cst_17 {dimension_numbers = #tpu.dot_dimension_numbers<[1], [0], [0], [1], [0, 0, 1, 1], [], []>} : vector<8x32xf32>, vector<32x2xf32>, vector<8x2xf32> -> vector<8x2xf32>
    %cst_18 = arith.constant dense<0.000000e+00> : vector<8x32xf32>
    %30 = tpu.matmul %29, %28, %cst_18 {dimension_numbers = #tpu.dot_dimension_numbers<[1], [0], [0], [1], [0, 0, 1, 1], [], []>} : vector<8x2xf32>, vector<2x32xf32>, vector<8x32xf32> -> vector<8x32xf32>
    %31 = arith.subf %26, %30 : vector<8x32xf32>
    %32 = arith.mulf %31, %31 : vector<8x32xf32>
    %cst_19 = arith.constant dense<0.000000e+00> : vector<8x2xf32>
    %33 = tpu.matmul %32, %27, %cst_19 {dimension_numbers = #tpu.dot_dimension_numbers<[1], [0], [0], [1], [0, 0, 1, 1], [], []>} : vector<8x32xf32>, vector<32x2xf32>, vector<8x2xf32> -> vector<8x2xf32>
    %cst_20 = arith.constant dense<0.000000e+00> : vector<8x32xf32>
    %34 = tpu.matmul %33, %28, %cst_20 {dimension_numbers = #tpu.dot_dimension_numbers<[1], [0], [0], [1], [0, 0, 1, 1], [], []>} : vector<8x2xf32>, vector<2x32xf32>, vector<8x32xf32> -> vector<8x32xf32>
    %cst_21 = arith.constant 9.99999974E-6 : f32
    %35 = vector.broadcast %cst_21 : f32 to vector<8x32xf32>
    %36 = arith.addf %34, %35 : vector<8x32xf32>
    %37 = math.rsqrt %36 : vector<8x32xf32>
    %38 = arith.mulf %31, %37 : vector<8x32xf32>
    %c0_22 = arith.constant 0 : index
    %39 = memref.load %arg5[%c0_22] : memref<1xf32, #tpu.memory_space<smem>>
    %cst_23 = arith.constant 0.000000e+00 : f32
    %40 = vector.broadcast %cst_23 : f32 to vector<8x32xf32>
    %41 = arith.cmpf ogt, %38, %40 : vector<8x32xf32>
    %42 = vector.broadcast %39 : f32 to vector<8x32xf32>
    %43 = arith.mulf %42, %38 : vector<8x32xf32>
    %44 = arith.select %41, %38, %43 : vector<8x32xi1>, vector<8x32xf32>
    %c0_24 = arith.constant 0 : index
    %c0_25 = arith.constant 0 : index
    %45 = vector.load %arg6[%c0_24, %c0_25] : memref<8x32xf32, #tpu.memory_space<vmem>>, vector<8x32xf32>
    tpu.vector_store %arg6[%c0_24, %c0_25], %44 {strides = array<i32>} : memref<8x32xf32, #tpu.memory_space<vmem>>, vector<8x32xf32>,
    return
  }
  func.func @transform_0(%arg0: i32) -> (i32, i32, i32) {
    %c0_i32 = arith.constant 0 : i32
    %c0_i32_0 = arith.constant 0 : i32
    %c0_i32_1 = arith.constant 0 : i32
    return %arg0, %c0_i32, %c0_i32_0 : i32, i32, i32
  }
  func.func @transform_1(%arg0: i32) -> (i32, i32) {
    %c0_i32 = arith.constant 0 : i32
    %c0_i32_0 = arith.constant 0 : i32
    %c0_i32_1 = arith.constant 0 : i32
    return %c0_i32, %c0_i32_0 : i32, i32
  }
  func.func @transform_2(%arg0: i32) -> (i32, i32) {
    %c0_i32 = arith.constant 0 : i32
    %c0_i32_0 = arith.constant 0 : i32
    %c0_i32_1 = arith.constant 0 : i32
    return %c0_i32, %c0_i32_0 : i32, i32
  }
  func.func @transform_3(%arg0: i32) -> (i32, i32) {
    %c0_i32 = arith.constant 0 : i32
    %c0_i32_0 = arith.constant 0 : i32
    %c0_i32_1 = arith.constant 0 : i32
    return %c0_i32, %c0_i32_0 : i32, i32
  }
  func.func @transform_4(%arg0: i32) -> i32 {
    %c0_i32 = arith.constant 0 : i32
    %c0_i32_0 = arith.constant 0 : i32
    return %c0_i32 : i32
  }
  func.func @transform_5(%arg0: i32) -> (i32, i32) {
    %c0_i32 = arith.constant 0 : i32
    %c0_i32_0 = arith.constant 0 : i32
    return %c0_i32, %arg0 : i32, i32
  }
}

</mosaic_0001>

<llo_original>
// kernel: tpu_custom_call.1
$region0: #{tpu_custom_call.1}
  #allocation0 [shape = 'u32[]', space=smem, size = 0x4, offset = 0x4, fixed_abs, tag = 'smem constant byte address 0x4 - core index']
  #allocation1 [shape = 'u32[72,128]{1,0:T(1,128)}', space=vmem, size = 0x9000, scoped, tag = 'internal scratch']
  #allocation2 [shape = 'f32[29,32]{1,0:T(8,128)}', space=vmem, size = 0x4000, scoped, tag = 'scratch operand']
  #allocation3 [shape = 'f32[1]{0:T(128)S(6)}', space=smem, size = 0x200, scoped, tag = 'scoped memory for tpu_custom_call.1']
  %s0 = inlined_call_operand.vmem [shape: f32[2,4,22], index: 0, kind: input, shape index: {}]
  %s1 = inlined_call_operand.vmem [shape: f32[8,29], index: 1, kind: input, shape index: {}]
  %s2 = inlined_call_operand.vmem [shape: f32[32,2], index: 2, kind: input, shape index: {}]
  %s3 = inlined_call_operand.vmem [shape: f32[2,32], index: 3, kind: input, shape index: {}]
  %s4 = inlined_call_operand.<no memory space> [shape: f32[1], index: 4, kind: input, shape index: {}]
  %s5 = inlined_call_operand.hbm [shape: f32[8,32], index: 5, kind: output, shape index: {}]
  %s6 = sld [smem:[#allocation0]]
  $region30: #{tpu_custom_call.1} parent=0
    _
  %s8 = ssub.s32 1, %s6
  %s9 = scalar_select 0, %s8, %s6
  %10 = sst [smem:[#allocation3]] %s4
  $region1: #{tpu_custom_call.1} parent=0
    #allocation4 [shape = 'u8[4096]{0}', space=vmem, size = 0x1000, scoped, tag = 'output window, operand 0, single buffered']
    #allocation5 [shape = 's32[1]{0}', space=sflag, size = 0x4, scoped, tag = 'scoped memory for tpu_custom_call.1']
    %11 = vsyncpa [#allocation5], 0
    // Predicated region
    $region2: #{tpu_custom_call.1} parent=1 // pred_check
      _
    $region3: #{tpu_custom_call.1} parent=1 // pred_check_branch
      %13 = sbr.rel (0) target = $region5
    $region4: #{tpu_custom_call.1} parent=1 // pred_region
      _
    $region5: #{tpu_custom_call.1} parent=1 // pred_fallthru
      _
    // Predicated region
    $region6: #{tpu_custom_call.1} parent=1 // pred_check
      _
    $region7: #{tpu_custom_call.1} parent=1 // pred_check_branch
      %15 = sbr.rel (0) target = $region9
    $region8: #{tpu_custom_call.1} parent=1 // pred_region
      _
    $region9: #{tpu_custom_call.1} parent=1 // pred_fallthru
      _
    // Predicated region
    $region10: #{tpu_custom_call.1} parent=1 // pred_check
      _
    $region11: #{tpu_custom_call.1} parent=1 // pred_check_branch
      %17 = sbr.rel (0) target = $region13
    $region12: #{tpu_custom_call.1} parent=1 // pred_region
      _
    $region13: #{tpu_custom_call.1} parent=1 // pred_fallthru
      _
    // Predicated region
    $region14: #{tpu_custom_call.1} parent=1 // pred_check
      _
    $region15: #{tpu_custom_call.1} parent=1 // pred_check_branch
      %19 = sbr.rel (0) target = $region17
    $region16: #{tpu_custom_call.1} parent=1 // pred_region
      _
    $region17: #{tpu_custom_call.1} parent=1 // pred_fallthru
      _
    // Predicated region
    $region18: #{tpu_custom_call.1} parent=1 // pred_check
      _
    $region19: #{tpu_custom_call.1} parent=1 // pred_check_branch
      %21 = sbr.rel (0) target = $region21
    $region20: #{tpu_custom_call.1} parent=1 // pred_region
      _
    $region21: #{tpu_custom_call.1} parent=1 // pred_fallthru
      _
    %v22 = vld [vmem:[%s0] sm:$0xf]
    %v24 = vrot.slane %v22, 4
    %25 = vrot.lane.b32.xlu0 %v24, 127
    %v26 = vpop.permute.xlu0 %25
    %28 = vrot.lane.b32.xlu0 %v22, 126
    %v29 = vpop.permute.xlu0 %28
    %31 = vrot.lane.b32.xlu0 %v24, 125
    %v32 = vpop.permute.xlu0 %31
    %34 = vrot.lane.b32.xlu0 %v22, 124
    %v35 = vpop.permute.xlu0 %34
    %37 = vrot.lane.b32.xlu0 %v24, 123
    %v38 = vpop.permute.xlu0 %37
    %40 = vrot.lane.b32.xlu0 %v22, 122
    %v41 = vpop.permute.xlu0 %40
    %vm43 = vcmask 1043456
    %v44 = vsel %vm43, %v22, %v26
    %v45 = vsel %vm43, %v29, %v32
    %v46 = vsel %vm43, %v35, %v38
    %vm47 = vcmask 130048
    %48 = vst.msk [vmem:[#allocation2] sm:$0xff] %vm47, %v44
    %49 = vst.msk [vmem:[#allocation2 + $0x8] sm:$0xff] %vm47, %v45
    %50 = vst.msk [vmem:[#allocation2 + $0x10] sm:$0xff] %vm47, %v46
    %vm51 = vcmask 125952
    %52 = vst.msk [vmem:[#allocation2 + $0x18] sm:$0xf] %vm51, %v41
    %s53 = scalar_lea.vmem %s0, 4
    %v54 = vld [vmem:[%s53] sm:$0xf]
    %v56 = vrot.slane %v54, 4
    %57 = vrot.lane.b32.xlu0 %v56, 127
    %v58 = vpop.permute.xlu0 %57
    %60 = vrot.lane.b32.xlu0 %v54, 126
    %v61 = vpop.permute.xlu0 %60
    %63 = vrot.lane.b32.xlu0 %v56, 125
    %v64 = vpop.permute.xlu0 %63
    %66 = vrot.lane.b32.xlu0 %v54, 124
    %v67 = vpop.permute.xlu0 %66
    %69 = vrot.lane.b32.xlu0 %v56, 123
    %v70 = vpop.permute.xlu0 %69
    %72 = vrot.lane.b32.xlu0 %v54, 122
    %v73 = vpop.permute.xlu0 %72
    %v74 = vsel %vm43, %v54, %v58
    %v75 = vsel %vm43, %v61, %v64
    %v76 = vsel %vm43, %v67, %v70
    %80 = vrot.lane.b32.xlu0 %v74, 16
    %v81 = vpop.permute.xlu0 %80
    %82 = vrot.lane.b32.xlu0 %v75, 16
    %v83 = vpop.permute.xlu0 %82
    %84 = vrot.lane.b32.xlu0 %v76, 16
    %v85 = vpop.permute.xlu0 %84
    %86 = vrot.lane.b32.xlu0 %v73, 16
    %v87 = vpop.permute.xlu0 %86
    %vm92 = vcmask 261248
    %93 = vst.msk [vmem:[#allocation2] sm:$0xff] %vm92, %v81
    %94 = vst.msk [vmem:[#allocation2 + $0x8] sm:$0xff] %vm92, %v83
    %95 = vst.msk [vmem:[#allocation2 + $0x10] sm:$0xff] %vm92, %v85
    %vm96 = vcmask 257152
    %97 = vst.msk [vmem:[#allocation2 + $0x18] sm:$0xf] %vm96, %v87
    %vm98 = vcmask 253952
    %99 = vst.msk [vmem:[#allocation2 + $0x1c] sm:$0x1] %vm98, 1.0
    %v100 = vld [vmem:[%s1] sm:$0xff]
    %v101 = vld [vmem:[#allocation2] sm:$0xff]
    %v102 = vld [vmem:[#allocation2 + $0x8] sm:$0xff]
    %v103 = vld [vmem:[#allocation2 + $0x10] sm:$0xff]
    %v104 = vld [vmem:[#allocation2 + $0x18] sm:$0x1f]
    %vm105 = vcmask 236544
    %v107 = vsel %vm105, %v100, 0
    %vm109 = vcmask 1044480
    %v111 = vsel %vm109, %v104, 0
    %113 = vmatpush.msra.mxu0 0.0
    %114 = vmatpush.msra.mxu0 0.0
    %115 = vmatpush.msra.mxu0 0.0
    %116 = vmatpush.msra.mxu0 0.0
    %117 = vmatpush.msra.mxu0 0.0
    %118 = vmatpush.msra.mxu0 0.0
    %119 = vmatpush.msra.mxu0 0.0
    %120 = vmatpush.msra.mxu0 0.0
    %121 = vmatpush.msra.mxu0 0.0
    %122 = vmatpush.msra.mxu0 0.0
    %123 = vmatpush.msra.mxu0 0.0
    %124 = vmatpush.msra.mxu0 0.0
    %125 = vmatpush.msra.mxu0 %v111
    %126 = vmatpush.msra.mxu0 %v103
    %127 = vmatpush.msra.mxu0 %v102
    %128 = vmatpush.msra.mxu0 %v101
    %129 = vmatmul.f32.gmra.mxu0 %v107
    %v130 = vpop.f32.mrf.mxu0
    %v131 = vadd.f32 0.0, %v130
    %132 = vdwg.mxu0
    %v133 = vld [vmem:[%s2] sm:$0xff]
    %v134 = vld [vmem:[%s2 + $0x8] sm:$0xff]
    %v135 = vld [vmem:[%s2 + $0x10] sm:$0xff]
    %v136 = vld [vmem:[%s2 + $0x18] sm:$0xff]
    %v137 = vld [vmem:[%s3] sm:$0x3]
    %vm138 = vcmask 261120
    %v140 = vsel %vm138, %v131, 0
    %142 = vmatpush.msra.mxu0 0.0
    %143 = vmatpush.msra.mxu0 0.0
    %144 = vmatpush.msra.mxu0 0.0
    %145 = vmatpush.msra.mxu0 0.0
    %146 = vmatpush.msra.mxu0 0.0
    %147 = vmatpush.msra.mxu0 0.0
    %148 = vmatpush.msra.mxu0 0.0
    %149 = vmatpush.msra.mxu0 0.0
    %150 = vmatpush.msra.mxu0 0.0
    %151 = vmatpush.msra.mxu0 0.0
    %152 = vmatpush.msra.mxu0 0.0
    %153 = vmatpush.msra.mxu0 0.0
    %154 = vmatpush.msra.mxu0 %v136
    %155 = vmatpush.msra.mxu0 %v135
    %156 = vmatpush.msra.mxu0 %v134
    %157 = vmatpush.msra.mxu0 %v133
    %158 = vmatmul.f32.gmra.mxu0 %v140
    %v159 = vpop.f32.mrf.mxu0
    %v160 = vadd.f32 0.0, %v159
    %161 = vdwg.mxu0
    %vm162 = vcmask 15360
    %v164 = vsel %vm162, %v160, 0
    %vm166 = vcmask 1041408
    %v168 = vsel %vm166, %v137, 0
    %170 = vmatpush.msra.mxu0 0.0
    %171 = vmatpush.msra.mxu0 0.0
    %172 = vmatpush.msra.mxu0 0.0
    %173 = vmatpush.msra.mxu0 0.0
    %174 = vmatpush.msra.mxu0 0.0
    %175 = vmatpush.msra.mxu0 0.0
    %176 = vmatpush.msra.mxu0 0.0
    %177 = vmatpush.msra.mxu0 0.0
    %178 = vmatpush.msra.mxu0 0.0
    %179 = vmatpush.msra.mxu0 0.0
    %180 = vmatpush.msra.mxu0 0.0
    %181 = vmatpush.msra.mxu0 0.0
    %182 = vmatpush.msra.mxu0 0.0
    %183 = vmatpush.msra.mxu0 0.0
    %184 = vmatpush.msra.mxu0 0.0
    %185 = vmatpush.msra.mxu0 %v168
    %186 = vmatmul.f32.gmra.mxu0 %v164
    %v187 = vpop.f32.mrf.mxu0
    %v188 = vadd.f32 0.0, %v187
    %189 = vdwg.mxu0
    %v190 = vsub.f32 %v131, %v188
    %v191 = vmul.f32 %v190, %v190
    %v193 = vsel %vm138, %v191, 0
    %195 = vmatpush.msra.mxu0 0.0
    %196 = vmatpush.msra.mxu0 0.0
    %197 = vmatpush.msra.mxu0 0.0
    %198 = vmatpush.msra.mxu0 0.0
    %199 = vmatpush.msra.mxu0 0.0
    %200 = vmatpush.msra.mxu0 0.0
    %201 = vmatpush.msra.mxu0 0.0
    %202 = vmatpush.msra.mxu0 0.0
    %203 = vmatpush.msra.mxu0 0.0
    %204 = vmatpush.msra.mxu0 0.0
    %205 = vmatpush.msra.mxu0 0.0
    %206 = vmatpush.msra.mxu0 0.0
    %207 = vmatpush.msra.mxu0 %v136
    %208 = vmatpush.msra.mxu0 %v135
    %209 = vmatpush.msra.mxu0 %v134
    %210 = vmatpush.msra.mxu0 %v133
    %211 = vmatmul.f32.gmra.mxu0 %v193
    %v212 = vpop.f32.mrf.mxu0
    %v213 = vadd.f32 0.0, %v212
    %214 = vdwg.mxu0
    %v216 = vsel %vm162, %v213, 0
    %218 = vmatpush.msra.mxu0 0.0
    %219 = vmatpush.msra.mxu0 0.0
    %220 = vmatpush.msra.mxu0 0.0
    %221 = vmatpush.msra.mxu0 0.0
    %222 = vmatpush.msra.mxu0 0.0
    %223 = vmatpush.msra.mxu0 0.0
    %224 = vmatpush.msra.mxu0 0.0
    %225 = vmatpush.msra.mxu0 0.0
    %226 = vmatpush.msra.mxu0 0.0
    %227 = vmatpush.msra.mxu0 0.0
    %228 = vmatpush.msra.mxu0 0.0
    %229 = vmatpush.msra.mxu0 0.0
    %230 = vmatpush.msra.mxu0 0.0
    %231 = vmatpush.msra.mxu0 0.0
    %232 = vmatpush.msra.mxu0 0.0
    %233 = vmatpush.msra.mxu0 %v168
    %234 = vmatmul.f32.gmra.mxu0 %v216
    %v235 = vpop.f32.mrf.mxu0
    %v236 = vadd.f32 1e-05, %v235
    %237 = vdwg.mxu0
    %v238 = vrsqrt.pop %v236
    %v239 = vmul.f32 %v238, %v236
    %v240 = vmul.f32 %v239, %v238
    %v241 = vmul.f32 0.5, %v240
    %v242 = vsub.f32 1.5, %v241
    %v243 = vmul.f32 %v238, %v242
    %vm244 = vweird.f32 %v236
    %vm245 = vweird.f32 %v238
    %vm246 = vmor %vm244, %vm245
    %v247 = vsel %vm246, %v238, %v243
    %v248 = vmul.f32 %v190, %v247
    %s249 = sld [smem:[#allocation3]]
    %vm250 = vcmp.gt.f32.partialorder %v248, 0.0
    %v251 = vstv %s249
    %v252 = vmul.f32 %v251, %v248
    %v253 = vsel %vm250, %v248, %v252
    %254 = vst.msk [vmem:[#allocation4] sm:$0xff] %vm138, %v253
    // Predicated region
    $region22: #{tpu_custom_call.1} parent=1 // pred_check
      _
    $region23: #{tpu_custom_call.1} parent=1 // pred_check_branch
      %256 = sbr.rel (0) target = $region25
    $region24: #{tpu_custom_call.1} parent=1 // pred_region
      %258 = vsyncadd [#allocation5], 0
      %s260 = sshll.u32 [#allocation4], 4
      %s261 = int_to_ptr.vmem [resolvable:$true] %s260
      %s262 = sshll.u32 %s5, 4
      %s263 = int_to_ptr.hbm [resolvable:$true] %s262
      %265 = dma.vmem_to_hbm [thread:$0]  %s261, 128, %s263, [#allocation5]
    $region25: #{tpu_custom_call.1} parent=1 // pred_fallthru
      _
    // Predicated region
    $region26: #{tpu_custom_call.1} parent=1 // pred_check
      _
    $region27: #{tpu_custom_call.1} parent=1 // pred_check_branch
      %267 = sbr.rel (0) target = $region29
    $region28: #{tpu_custom_call.1} parent=1 // pred_region
      %269 = dma.done [#allocation5], 128
    $region29: #{tpu_custom_call.1} parent=1 // pred_fallthru
      _
    %270 = vsyncpa [#allocation5], 1

</llo_original>
